<compile_context>
chip_gen: v7x
topology: tpu7x:2x2x1
jax: 0.10.0
libtpu: 0.0.40
codegen_flags: <defaults>
</compile_context>

<pallas_src>
import jax
import jax.numpy as jnp
from jax.experimental import pallas as pl
from jax.experimental.pallas import tpu as pltpu

BN_EPS = 1e-5
NEG_SLOPE = 0.01  # torch.nn.functional.leaky_relu default


def _round_up(x, m):
    return ((x + m - 1) // m) * m


def _autoencoder_kernel(
    x_ref,                       # [F, TB]  (features on sublanes, batch on lanes)
    w1, b1, w2, b2, w3, b3, w4, b4, w5, b5, w6, b6, w7, b7, w8, b8,
    o_ref,                       # [F, TB]
):
    def layer(h, w_ref, b_ref):
        # w: [out, in], h: [in, TB] -> [out, TB]; bias [out, 1] broadcasts along lanes.
        return jnp.dot(w_ref[...], h, preferred_element_type=jnp.float32) + b_ref[...]

    def lrelu(h):
        return jnp.where(h > 0, h, NEG_SLOPE * h)

    h = x_ref[...].astype(jnp.float32)
    h = lrelu(layer(h, w1, b1))   # layer1: Linear(F, 32) + Dropout (identity in eval)
    h = lrelu(layer(h, w2, b2))   # layer2: Linear(32, 16) + BatchNorm1d(16) folded in
    h = lrelu(layer(h, w3, b3))   # layer3: Linear(16, 8)  + BatchNorm1d(8)  folded in
    h = lrelu(layer(h, w4, b4))   # layer4: Linear(8, 8)
    h = lrelu(layer(h, w5, b5))   # layer5: Linear(8, 8)
    h = lrelu(layer(h, w6, b6))   # layer6: Linear(8, 16) + Dropout (identity in eval)
    h = lrelu(layer(h, w7, b7))   # layer7: Linear(16, 32)
    h = layer(h, w8, b8)          # layer8: Linear(32, F)
    o_ref[...] = jax.nn.sigmoid(h).astype(o_ref.dtype)


def init_params(n_features, key):
    """Param init mimicking torch.nn.Linear default (U[-1/sqrt(in), 1/sqrt(in)]).

    Weights are stored torch-native: W has shape [out, in]; biases are [out].
    BatchNorm params use torch init values (gamma=1, beta=0, mean=0, var=1).
    """
    dims = [n_features, 32, 16, 8, 8, 8, 16, 32, n_features]
    params = {}
    for i in range(8):
        fan_in, fan_out = dims[i], dims[i + 1]
        key, kw, kb = jax.random.split(key, 3)
        bound = 1.0 / (fan_in ** 0.5)
        params[f"w{i+1}"] = jax.random.uniform(
            kw, (fan_out, fan_in), jnp.float32, -bound, bound)
        params[f"b{i+1}"] = jax.random.uniform(
            kb, (fan_out,), jnp.float32, -bound, bound)
    for name, width in (("2", 16), ("3", 8)):
        params[f"gamma{name}"] = jnp.ones((width,), jnp.float32)
        params[f"beta{name}"] = jnp.zeros((width,), jnp.float32)
        params[f"mean{name}"] = jnp.zeros((width,), jnp.float32)
        params[f"var{name}"] = jnp.ones((width,), jnp.float32)
    return params


def _fold_batchnorm(w, b, gamma, beta, mean, var):
    """Fold eval-mode BatchNorm1d into the preceding Linear (w: [out, in])."""
    scale = gamma * jax.lax.rsqrt(var + BN_EPS)       # [out]
    w_f = w * scale[:, None]
    b_f = (b - mean) * scale + beta
    return w_f, b_f


def autoencoder_forward(x, params, *, batch_tile=2048):
    assert batch_tile % 128 == 0
    b, f = x.shape

    # Fold the two BatchNorm1d layers into the adjacent Linears (host side).
    w2, b2 = _fold_batchnorm(params["w2"], params["b2"], params["gamma2"],
                             params["beta2"], params["mean2"], params["var2"])
    w3, b3 = _fold_batchnorm(params["w3"], params["b3"], params["gamma3"],
                             params["beta3"], params["mean3"], params["var3"])

    ws = [params["w1"], w2, w3, params["w4"], params["w5"],
          params["w6"], params["w7"], params["w8"]]
    bs = [params["b1"], b2, b3, params["b4"], params["b5"],
          params["b6"], params["b7"], params["b8"]]
    bs = [bb.reshape(-1, 1) for bb in bs]             # [out, 1] for lane-broadcast

    flat_params = []
    for w, bb in zip(ws, bs):
        flat_params += [w, bb]

    # Batch tile: large for pipelining / lane density, padded to a multiple of 128.
    tb = min(batch_tile, _round_up(b, 128))
    b_pad = _round_up(b, tb)
    grid = (b_pad // tb,)

    # Transposed activations: [F, B_pad] with the batch on the lane axis.
    x_t = jnp.pad(x.T, ((0, 0), (0, b_pad - b)))

    io_spec = pl.BlockSpec((f, tb), lambda i: (0, i))
    in_specs = [io_spec]
    for arr in flat_params:
        # Tiny weights/biases: full-array blocks, resident across all grid steps.
        in_specs.append(pl.BlockSpec(arr.shape, lambda i: (0, 0)))

    dims = [f, 32, 16, 8, 8, 8, 16, 32, f]
    flops = 2 * b_pad * sum(dims[i] * dims[i + 1] for i in range(8))
    weight_bytes = sum(int(a.size) * a.dtype.itemsize for a in flat_params)
    cost = pl.CostEstimate(
        flops=flops,
        transcendentals=b_pad * f,                     # sigmoid
        bytes_accessed=2 * b_pad * f * 4 + weight_bytes,
    )

    out_t = pl.pallas_call(
        _autoencoder_kernel,
        out_shape=jax.ShapeDtypeStruct((f, b_pad), jnp.float32),
        grid=grid,
        in_specs=in_specs,
        out_specs=io_spec,
        compiler_params=pltpu.CompilerParams(
            dimension_semantics=("parallel",)),        # 2x on v7x megacore
        cost_estimate=cost,
    )(x_t, *flat_params)

    return out_t[:, :b].T


def reference_forward(x, params):
    """Pure-JAX reference (un-folded BatchNorm) for correctness checking."""
    def lrelu(h):
        return jnp.where(h > 0, h, NEG_SLOPE * h)

    def lin(h, w, b):
        return h @ w.T + b

    def bn(h, g, be, m, v):
        return (h - m) * g / jnp.sqrt(v + BN_EPS) + be

    h = lrelu(lin(x, params["w1"], params["b1"]))
    h = lrelu(bn(lin(h, params["w2"], params["b2"]), params["gamma2"],
                 params["beta2"], params["mean2"], params["var2"]))
    h = lrelu(bn(lin(h, params["w3"], params["b3"]), params["gamma3"],
                 params["beta3"], params["mean3"], params["var3"]))
    h = lrelu(lin(h, params["w4"], params["b4"]))
    h = lrelu(lin(h, params["w5"], params["b5"]))
    h = lrelu(lin(h, params["w6"], params["b6"]))
    h = lrelu(lin(h, params["w7"], params["b7"]))
    return jax.nn.sigmoid(lin(h, params["w8"], params["b8"]))


if __name__ == "__main__":
    n_features = 32
    batch = 8

    key = jax.random.PRNGKey(0)
    key, kx = jax.random.split(key)
    x = jax.random.normal(kx, (batch, n_features), jnp.float32)

    params = init_params(n_features, key)

    out = jax.block_until_ready(autoencoder_forward(x, params))
    ref = jax.block_until_ready(reference_forward(x, params))

    assert out.shape == (batch, n_features), out.shape
    assert out.dtype == jnp.float32
    assert bool(jnp.all(jnp.isfinite(out)))
    assert bool(jnp.all((out >= 0.0) & (out <= 1.0)))      # sigmoid output range
    # Loose tolerance to stay robust to MXU vs XLA f32-matmul precision paths.
    assert bool(jnp.max(jnp.abs(out - ref)) < 1e-2)

    print("KERNEL_OK")
</pallas_src>

<mosaic_0001>
module attributes {stable_mosaic.version = 11 : i64} {
  func.func @_autoencoder_kernel(%arg0: i32, %arg1: memref<32x128xf32, #tpu.memory_space<vmem>>, %arg2: memref<32x32xf32, #tpu.memory_space<vmem>>, %arg3: memref<32x1xf32, #tpu.memory_space<vmem>>, %arg4: memref<16x32xf32, #tpu.memory_space<vmem>>, %arg5: memref<16x1xf32, #tpu.memory_space<vmem>>, %arg6: memref<8x16xf32, #tpu.memory_space<vmem>>, %arg7: memref<8x1xf32, #tpu.memory_space<vmem>>, %arg8: memref<8x8xf32, #tpu.memory_space<vmem>>, %arg9: memref<8x1xf32, #tpu.memory_space<vmem>>, %arg10: memref<8x8xf32, #tpu.memory_space<vmem>>, %arg11: memref<8x1xf32, #tpu.memory_space<vmem>>, %arg12: memref<16x8xf32, #tpu.memory_space<vmem>>, %arg13: memref<16x1xf32, #tpu.memory_space<vmem>>, %arg14: memref<32x16xf32, #tpu.memory_space<vmem>>, %arg15: memref<32x1xf32, #tpu.memory_space<vmem>>, %arg16: memref<32x32xf32, #tpu.memory_space<vmem>>, %arg17: memref<32x1xf32, #tpu.memory_space<vmem>>, %arg18: memref<32x128xf32, #tpu.memory_space<vmem>>) attributes {dimension_semantics = [#tpu.dimension_semantics<parallel>], iteration_bounds = array<i64: 1>, scalar_prefetch = 0 : i64, scratch_operands = 0 : i64, tpu.core_type = #tpu.core_type<tc>, window_params = [{transform_indices = @transform_0, window_bounds = array<i64: 32, 128>}, {pipeline_mode = #tpu.pipeline_mode<synchronous>, transform_indices = @transform_1, window_bounds = array<i64: 32, 32>}, {pipeline_mode = #tpu.pipeline_mode<synchronous>, transform_indices = @transform_2, window_bounds = array<i64: 32, 1>}, {pipeline_mode = #tpu.pipeline_mode<synchronous>, transform_indices = @transform_3, window_bounds = array<i64: 16, 32>}, {pipeline_mode = #tpu.pipeline_mode<synchronous>, transform_indices = @transform_4, window_bounds = array<i64: 16, 1>}, {pipeline_mode = #tpu.pipeline_mode<synchronous>, transform_indices = @transform_5, window_bounds = array<i64: 8, 16>}, {pipeline_mode = #tpu.pipeline_mode<synchronous>, transform_indices = @transform_6, window_bounds = array<i64: 8, 1>}, {pipeline_mode = #tpu.pipeline_mode<synchronous>, transform_indices = @transform_7, window_bounds = array<i64: 8, 8>}, {pipeline_mode = #tpu.pipeline_mode<synchronous>, transform_indices = @transform_8, window_bounds = array<i64: 8, 1>}, {pipeline_mode = #tpu.pipeline_mode<synchronous>, transform_indices = @transform_9, window_bounds = array<i64: 8, 8>}, {pipeline_mode = #tpu.pipeline_mode<synchronous>, transform_indices = @transform_10, window_bounds = array<i64: 8, 1>}, {pipeline_mode = #tpu.pipeline_mode<synchronous>, transform_indices = @transform_11, window_bounds = array<i64: 16, 8>}, {pipeline_mode = #tpu.pipeline_mode<synchronous>, transform_indices = @transform_12, window_bounds = array<i64: 16, 1>}, {pipeline_mode = #tpu.pipeline_mode<synchronous>, transform_indices = @transform_13, window_bounds = array<i64: 32, 16>}, {pipeline_mode = #tpu.pipeline_mode<synchronous>, transform_indices = @transform_14, window_bounds = array<i64: 32, 1>}, {pipeline_mode = #tpu.pipeline_mode<synchronous>, transform_indices = @transform_15, window_bounds = array<i64: 32, 32>}, {pipeline_mode = #tpu.pipeline_mode<synchronous>, transform_indices = @transform_16, window_bounds = array<i64: 32, 1>}, {transform_indices = @transform_17, window_bounds = array<i64: 32, 128>}]} {
    %c0 = arith.constant 0 : index
    %c0_0 = arith.constant 0 : index
    %0 = vector.load %arg1[%c0, %c0_0] : memref<32x128xf32, #tpu.memory_space<vmem>>, vector<32x128xf32>
    %c0_1 = arith.constant 0 : index
    %c0_2 = arith.constant 0 : index
    %1 = vector.load %arg2[%c0_1, %c0_2] : memref<32x32xf32, #tpu.memory_space<vmem>>, vector<32x32xf32>
    %cst = arith.constant dense<0.000000e+00> : vector<32x128xf32>
    %2 = tpu.matmul %1, %0, %cst {dimension_numbers = #tpu.dot_dimension_numbers<[1], [0], [0], [1], [0, 0, 1, 1], [], []>} : vector<32x32xf32>, vector<32x128xf32>, vector<32x128xf32> -> vector<32x128xf32>
    %c0_3 = arith.constant 0 : index
    %c0_4 = arith.constant 0 : index
    %3 = vector.load %arg3[%c0_3, %c0_4] : memref<32x1xf32, #tpu.memory_space<vmem>>, vector<32x1xf32>
    %4 = vector.broadcast %3 : vector<32x1xf32> to vector<32x128xf32>
    %5 = arith.addf %2, %4 : vector<32x128xf32>
    %cst_5 = arith.constant 0.000000e+00 : f32
    %6 = vector.broadcast %cst_5 : f32 to vector<32x128xf32>
    %7 = arith.cmpf ogt, %5, %6 : vector<32x128xf32>
    %cst_6 = arith.constant 0.00999999977 : f32
    %8 = vector.broadcast %cst_6 : f32 to vector<32x128xf32>
    %9 = arith.mulf %8, %5 : vector<32x128xf32>
    %10 = arith.select %7, %5, %9 : vector<32x128xi1>, vector<32x128xf32>
    %c0_7 = arith.constant 0 : index
    %c0_8 = arith.constant 0 : index
    %11 = vector.load %arg4[%c0_7, %c0_8] : memref<16x32xf32, #tpu.memory_space<vmem>>, vector<16x32xf32>
    %cst_9 = arith.constant dense<0.000000e+00> : vector<16x128xf32>
    %12 = tpu.matmul %11, %10, %cst_9 {dimension_numbers = #tpu.dot_dimension_numbers<[1], [0], [0], [1], [0, 0, 1, 1], [], []>} : vector<16x32xf32>, vector<32x128xf32>, vector<16x128xf32> -> vector<16x128xf32>
    %c0_10 = arith.constant 0 : index
    %c0_11 = arith.constant 0 : index
    %13 = vector.load %arg5[%c0_10, %c0_11] : memref<16x1xf32, #tpu.memory_space<vmem>>, vector<16x1xf32>
    %14 = vector.broadcast %13 : vector<16x1xf32> to vector<16x128xf32>
    %15 = arith.addf %12, %14 : vector<16x128xf32>
    %cst_12 = arith.constant 0.000000e+00 : f32
    %16 = vector.broadcast %cst_12 : f32 to vector<16x128xf32>
    %17 = arith.cmpf ogt, %15, %16 : vector<16x128xf32>
    %cst_13 = arith.constant 0.00999999977 : f32
    %18 = vector.broadcast %cst_13 : f32 to vector<16x128xf32>
    %19 = arith.mulf %18, %15 : vector<16x128xf32>
    %20 = arith.select %17, %15, %19 : vector<16x128xi1>, vector<16x128xf32>
    %c0_14 = arith.constant 0 : index
    %c0_15 = arith.constant 0 : index
    %21 = vector.load %arg6[%c0_14, %c0_15] : memref<8x16xf32, #tpu.memory_space<vmem>>, vector<8x16xf32>
    %cst_16 = arith.constant dense<0.000000e+00> : vector<8x128xf32>
    %22 = tpu.matmul %21, %20, %cst_16 {dimension_numbers = #tpu.dot_dimension_numbers<[1], [0], [0], [1], [0, 0, 1, 1], [], []>} : vector<8x16xf32>, vector<16x128xf32>, vector<8x128xf32> -> vector<8x128xf32>
    %c0_17 = arith.constant 0 : index
    %c0_18 = arith.constant 0 : index
    %23 = vector.load %arg7[%c0_17, %c0_18] : memref<8x1xf32, #tpu.memory_space<vmem>>, vector<8x1xf32>
    %24 = vector.broadcast %23 : vector<8x1xf32> to vector<8x128xf32>
    %25 = arith.addf %22, %24 : vector<8x128xf32>
    %cst_19 = arith.constant 0.000000e+00 : f32
    %26 = vector.broadcast %cst_19 : f32 to vector<8x128xf32>
    %27 = arith.cmpf ogt, %25, %26 : vector<8x128xf32>
    %cst_20 = arith.constant 0.00999999977 : f32
    %28 = vector.broadcast %cst_20 : f32 to vector<8x128xf32>
    %29 = arith.mulf %28, %25 : vector<8x128xf32>
    %30 = arith.select %27, %25, %29 : vector<8x128xi1>, vector<8x128xf32>
    %c0_21 = arith.constant 0 : index
    %c0_22 = arith.constant 0 : index
    %31 = vector.load %arg8[%c0_21, %c0_22] : memref<8x8xf32, #tpu.memory_space<vmem>>, vector<8x8xf32>
    %cst_23 = arith.constant dense<0.000000e+00> : vector<8x128xf32>
    %32 = tpu.matmul %31, %30, %cst_23 {dimension_numbers = #tpu.dot_dimension_numbers<[1], [0], [0], [1], [0, 0, 1, 1], [], []>} : vector<8x8xf32>, vector<8x128xf32>, vector<8x128xf32> -> vector<8x128xf32>
    %c0_24 = arith.constant 0 : index
    %c0_25 = arith.constant 0 : index
    %33 = vector.load %arg9[%c0_24, %c0_25] : memref<8x1xf32, #tpu.memory_space<vmem>>, vector<8x1xf32>
    %34 = vector.broadcast %33 : vector<8x1xf32> to vector<8x128xf32>
    %35 = arith.addf %32, %34 : vector<8x128xf32>
    %cst_26 = arith.constant 0.000000e+00 : f32
    %36 = vector.broadcast %cst_26 : f32 to vector<8x128xf32>
    %37 = arith.cmpf ogt, %35, %36 : vector<8x128xf32>
    %cst_27 = arith.constant 0.00999999977 : f32
    %38 = vector.broadcast %cst_27 : f32 to vector<8x128xf32>
    %39 = arith.mulf %38, %35 : vector<8x128xf32>
    %40 = arith.select %37, %35, %39 : vector<8x128xi1>, vector<8x128xf32>
    %c0_28 = arith.constant 0 : index
    %c0_29 = arith.constant 0 : index
    %41 = vector.load %arg10[%c0_28, %c0_29] : memref<8x8xf32, #tpu.memory_space<vmem>>, vector<8x8xf32>
    %cst_30 = arith.constant dense<0.000000e+00> : vector<8x128xf32>
    %42 = tpu.matmul %41, %40, %cst_30 {dimension_numbers = #tpu.dot_dimension_numbers<[1], [0], [0], [1], [0, 0, 1, 1], [], []>} : vector<8x8xf32>, vector<8x128xf32>, vector<8x128xf32> -> vector<8x128xf32>
    %c0_31 = arith.constant 0 : index
    %c0_32 = arith.constant 0 : index
    %43 = vector.load %arg11[%c0_31, %c0_32] : memref<8x1xf32, #tpu.memory_space<vmem>>, vector<8x1xf32>
    %44 = vector.broadcast %43 : vector<8x1xf32> to vector<8x128xf32>
    %45 = arith.addf %42, %44 : vector<8x128xf32>
    %cst_33 = arith.constant 0.000000e+00 : f32
    %46 = vector.broadcast %cst_33 : f32 to vector<8x128xf32>
    %47 = arith.cmpf ogt, %45, %46 : vector<8x128xf32>
    %cst_34 = arith.constant 0.00999999977 : f32
    %48 = vector.broadcast %cst_34 : f32 to vector<8x128xf32>
    %49 = arith.mulf %48, %45 : vector<8x128xf32>
    %50 = arith.select %47, %45, %49 : vector<8x128xi1>, vector<8x128xf32>
    %c0_35 = arith.constant 0 : index
    %c0_36 = arith.constant 0 : index
    %51 = vector.load %arg12[%c0_35, %c0_36] : memref<16x8xf32, #tpu.memory_space<vmem>>, vector<16x8xf32>
    %cst_37 = arith.constant dense<0.000000e+00> : vector<16x128xf32>
    %52 = tpu.matmul %51, %50, %cst_37 {dimension_numbers = #tpu.dot_dimension_numbers<[1], [0], [0], [1], [0, 0, 1, 1], [], []>} : vector<16x8xf32>, vector<8x128xf32>, vector<16x128xf32> -> vector<16x128xf32>
    %c0_38 = arith.constant 0 : index
    %c0_39 = arith.constant 0 : index
    %53 = vector.load %arg13[%c0_38, %c0_39] : memref<16x1xf32, #tpu.memory_space<vmem>>, vector<16x1xf32>
    %54 = vector.broadcast %53 : vector<16x1xf32> to vector<16x128xf32>
    %55 = arith.addf %52, %54 : vector<16x128xf32>
    %cst_40 = arith.constant 0.000000e+00 : f32
    %56 = vector.broadcast %cst_40 : f32 to vector<16x128xf32>
    %57 = arith.cmpf ogt, %55, %56 : vector<16x128xf32>
    %cst_41 = arith.constant 0.00999999977 : f32
    %58 = vector.broadcast %cst_41 : f32 to vector<16x128xf32>
    %59 = arith.mulf %58, %55 : vector<16x128xf32>
    %60 = arith.select %57, %55, %59 : vector<16x128xi1>, vector<16x128xf32>
    %c0_42 = arith.constant 0 : index
    %c0_43 = arith.constant 0 : index
    %61 = vector.load %arg14[%c0_42, %c0_43] : memref<32x16xf32, #tpu.memory_space<vmem>>, vector<32x16xf32>
    %cst_44 = arith.constant dense<0.000000e+00> : vector<32x128xf32>
    %62 = tpu.matmul %61, %60, %cst_44 {dimension_numbers = #tpu.dot_dimension_numbers<[1], [0], [0], [1], [0, 0, 1, 1], [], []>} : vector<32x16xf32>, vector<16x128xf32>, vector<32x128xf32> -> vector<32x128xf32>
    %c0_45 = arith.constant 0 : index
    %c0_46 = arith.constant 0 : index
    %63 = vector.load %arg15[%c0_45, %c0_46] : memref<32x1xf32, #tpu.memory_space<vmem>>, vector<32x1xf32>
    %64 = vector.broadcast %63 : vector<32x1xf32> to vector<32x128xf32>
    %65 = arith.addf %62, %64 : vector<32x128xf32>
    %cst_47 = arith.constant 0.000000e+00 : f32
    %66 = vector.broadcast %cst_47 : f32 to vector<32x128xf32>
    %67 = arith.cmpf ogt, %65, %66 : vector<32x128xf32>
    %cst_48 = arith.constant 0.00999999977 : f32
    %68 = vector.broadcast %cst_48 : f32 to vector<32x128xf32>
    %69 = arith.mulf %68, %65 : vector<32x128xf32>
    %70 = arith.select %67, %65, %69 : vector<32x128xi1>, vector<32x128xf32>
    %c0_49 = arith.constant 0 : index
    %c0_50 = arith.constant 0 : index
    %71 = vector.load %arg16[%c0_49, %c0_50] : memref<32x32xf32, #tpu.memory_space<vmem>>, vector<32x32xf32>
    %cst_51 = arith.constant dense<0.000000e+00> : vector<32x128xf32>
    %72 = tpu.matmul %71, %70, %cst_51 {dimension_numbers = #tpu.dot_dimension_numbers<[1], [0], [0], [1], [0, 0, 1, 1], [], []>} : vector<32x32xf32>, vector<32x128xf32>, vector<32x128xf32> -> vector<32x128xf32>
    %c0_52 = arith.constant 0 : index
    %c0_53 = arith.constant 0 : index
    %73 = vector.load %arg17[%c0_52, %c0_53] : memref<32x1xf32, #tpu.memory_space<vmem>>, vector<32x1xf32>
    %74 = vector.broadcast %73 : vector<32x1xf32> to vector<32x128xf32>
    %75 = arith.addf %72, %74 : vector<32x128xf32>
    %76 = arith.negf %75 : vector<32x128xf32>
    %77 = math.exp %76 : vector<32x128xf32>
    %cst_54 = arith.constant 1.000000e+00 : f32
    %78 = vector.broadcast %cst_54 : f32 to vector<32x128xf32>
    %79 = arith.addf %78, %77 : vector<32x128xf32>
    %80 = arith.divf %78, %79 : vector<32x128xf32>
    %c0_55 = arith.constant 0 : index
    %c0_56 = arith.constant 0 : index
    %81 = vector.load %arg18[%c0_55, %c0_56] : memref<32x128xf32, #tpu.memory_space<vmem>>, vector<32x128xf32>
    tpu.vector_store %arg18[%c0_55, %c0_56], %80 {strides = array<i32>} : memref<32x128xf32, #tpu.memory_space<vmem>>, vector<32x128xf32>,
    return
  }
  func.func @transform_0(%arg0: i32) -> (i32, i32) {
    %c0_i32 = arith.constant 0 : i32
    %c0_i32_0 = arith.constant 0 : i32
    return %c0_i32, %arg0 : i32, i32
  }
  func.func @transform_1(%arg0: i32) -> (i32, i32) {
    %c0_i32 = arith.constant 0 : i32
    %c0_i32_0 = arith.constant 0 : i32
    %c0_i32_1 = arith.constant 0 : i32
    return %c0_i32, %c0_i32_0 : i32, i32
  }
  func.func @transform_2(%arg0: i32) -> (i32, i32) {
    %c0_i32 = arith.constant 0 : i32
    %c0_i32_0 = arith.constant 0 : i32
    %c0_i32_1 = arith.constant 0 : i32
    return %c0_i32, %c0_i32_0 : i32, i32
  }
  func.func @transform_3(%arg0: i32) -> (i32, i32) {
    %c0_i32 = arith.constant 0 : i32
    %c0_i32_0 = arith.constant 0 : i32
    %c0_i32_1 = arith.constant 0 : i32
    return %c0_i32, %c0_i32_0 : i32, i32
  }
  func.func @transform_4(%arg0: i32) -> (i32, i32) {
    %c0_i32 = arith.constant 0 : i32
    %c0_i32_0 = arith.constant 0 : i32
    %c0_i32_1 = arith.constant 0 : i32
    return %c0_i32, %c0_i32_0 : i32, i32
  }
  func.func @transform_5(%arg0: i32) -> (i32, i32) {
    %c0_i32 = arith.constant 0 : i32
    %c0_i32_0 = arith.constant 0 : i32
    %c0_i32_1 = arith.constant 0 : i32
    return %c0_i32, %c0_i32_0 : i32, i32
  }
  func.func @transform_6(%arg0: i32) -> (i32, i32) {
    %c0_i32 = arith.constant 0 : i32
    %c0_i32_0 = arith.constant 0 : i32
    %c0_i32_1 = arith.constant 0 : i32
    return %c0_i32, %c0_i32_0 : i32, i32
  }
  func.func @transform_7(%arg0: i32) -> (i32, i32) {
    %c0_i32 = arith.constant 0 : i32
    %c0_i32_0 = arith.constant 0 : i32
    %c0_i32_1 = arith.constant 0 : i32
    return %c0_i32, %c0_i32_0 : i32, i32
  }
  func.func @transform_8(%arg0: i32) -> (i32, i32) {
    %c0_i32 = arith.constant 0 : i32
    %c0_i32_0 = arith.constant 0 : i32
    %c0_i32_1 = arith.constant 0 : i32
    return %c0_i32, %c0_i32_0 : i32, i32
  }
  func.func @transform_9(%arg0: i32) -> (i32, i32) {
    %c0_i32 = arith.constant 0 : i32
    %c0_i32_0 = arith.constant 0 : i32
    %c0_i32_1 = arith.constant 0 : i32
    return %c0_i32, %c0_i32_0 : i32, i32
  }
  func.func @transform_10(%arg0: i32) -> (i32, i32) {
    %c0_i32 = arith.constant 0 : i32
    %c0_i32_0 = arith.constant 0 : i32
    %c0_i32_1 = arith.constant 0 : i32
    return %c0_i32, %c0_i32_0 : i32, i32
  }
  func.func @transform_11(%arg0: i32) -> (i32, i32) {
    %c0_i32 = arith.constant 0 : i32
    %c0_i32_0 = arith.constant 0 : i32
    %c0_i32_1 = arith.constant 0 : i32
    return %c0_i32, %c0_i32_0 : i32, i32
  }
  func.func @transform_12(%arg0: i32) -> (i32, i32) {
    %c0_i32 = arith.constant 0 : i32
    %c0_i32_0 = arith.constant 0 : i32
    %c0_i32_1 = arith.constant 0 : i32
    return %c0_i32, %c0_i32_0 : i32, i32
  }
  func.func @transform_13(%arg0: i32) -> (i32, i32) {
    %c0_i32 = arith.constant 0 : i32
    %c0_i32_0 = arith.constant 0 : i32
    %c0_i32_1 = arith.constant 0 : i32
    return %c0_i32, %c0_i32_0 : i32, i32
  }
  func.func @transform_14(%arg0: i32) -> (i32, i32) {
    %c0_i32 = arith.constant 0 : i32
    %c0_i32_0 = arith.constant 0 : i32
    %c0_i32_1 = arith.constant 0 : i32
    return %c0_i32, %c0_i32_0 : i32, i32
  }
  func.func @transform_15(%arg0: i32) -> (i32, i32) {
    %c0_i32 = arith.constant 0 : i32
    %c0_i32_0 = arith.constant 0 : i32
    %c0_i32_1 = arith.constant 0 : i32
    return %c0_i32, %c0_i32_0 : i32, i32
  }
  func.func @transform_16(%arg0: i32) -> (i32, i32) {
    %c0_i32 = arith.constant 0 : i32
    %c0_i32_0 = arith.constant 0 : i32
    %c0_i32_1 = arith.constant 0 : i32
    return %c0_i32, %c0_i32_0 : i32, i32
  }
  func.func @transform_17(%arg0: i32) -> (i32, i32) {
    %c0_i32 = arith.constant 0 : i32
    %c0_i32_0 = arith.constant 0 : i32
    return %c0_i32, %arg0 : i32, i32
  }
}

</mosaic_0001>

<llo_original>
// kernel: tpu_custom_call.1
$region0: #{tpu_custom_call.1}
  #allocation0 [shape = 'u32[]', space=smem, size = 0x4, offset = 0x4, fixed_abs, tag = 'smem constant byte address 0x4 - core index']
  #allocation1 [shape = 'u32[144,128]{1,0:T(1,128)}', space=vmem, size = 0x12000, scoped, tag = 'internal scratch']
  %s0 = inlined_call_operand.vmem [shape: f32[32,128], index: 0, kind: input, shape index: {}]
  %s1 = inlined_call_operand.vmem [shape: f32[32,32], index: 1, kind: input, shape index: {}]
  %s2 = inlined_call_operand.vmem [shape: f32[32,1], index: 2, kind: input, shape index: {}]
  %s3 = inlined_call_operand.vmem [shape: f32[16,32], index: 3, kind: input, shape index: {}]
  %s4 = inlined_call_operand.vmem [shape: f32[16,1], index: 4, kind: input, shape index: {}]
  %s5 = inlined_call_operand.vmem [shape: f32[8,16], index: 5, kind: input, shape index: {}]
  %s6 = inlined_call_operand.vmem [shape: f32[8,1], index: 6, kind: input, shape index: {}]
  %s7 = inlined_call_operand.vmem [shape: f32[8,8], index: 7, kind: input, shape index: {}]
  %s8 = inlined_call_operand.vmem [shape: f32[8,1], index: 8, kind: input, shape index: {}]
  %s9 = inlined_call_operand.vmem [shape: f32[8,8], index: 9, kind: input, shape index: {}]
  %s10 = inlined_call_operand.vmem [shape: f32[8,1], index: 10, kind: input, shape index: {}]
  %s11 = inlined_call_operand.vmem [shape: f32[16,8], index: 11, kind: input, shape index: {}]
  %s12 = inlined_call_operand.vmem [shape: f32[16,1], index: 12, kind: input, shape index: {}]
  %s13 = inlined_call_operand.vmem [shape: f32[32,16], index: 13, kind: input, shape index: {}]
  %s14 = inlined_call_operand.vmem [shape: f32[32,1], index: 14, kind: input, shape index: {}]
  %s15 = inlined_call_operand.vmem [shape: f32[32,32], index: 15, kind: input, shape index: {}]
  %s16 = inlined_call_operand.vmem [shape: f32[32,1], index: 16, kind: input, shape index: {}]
  %s17 = inlined_call_operand.hbm [shape: f32[32,128], index: 17, kind: output, shape index: {}]
  %s18 = sld [smem:[#allocation0]]
  $region78: #{tpu_custom_call.1} parent=0
    _
  %s20 = ssub.s32 1, %s18
  %s21 = scalar_select 0, %s20, %s18
  $region1: #{tpu_custom_call.1} parent=0
    #allocation2 [shape = 'u8[16384]{0}', space=vmem, size = 0x4000, scoped, tag = 'output window, operand 0, single buffered']
    #allocation3 [shape = 's32[1]{0}', space=sflag, size = 0x4, scoped, tag = 'scoped memory for tpu_custom_call.1']
    %22 = vsyncpa [#allocation3], 0
    // Predicated region
    $region2: #{tpu_custom_call.1} parent=1 // pred_check
      _
    $region3: #{tpu_custom_call.1} parent=1 // pred_check_branch
      %24 = sbr.rel (0) target = $region5
    $region4: #{tpu_custom_call.1} parent=1 // pred_region
      _
    $region5: #{tpu_custom_call.1} parent=1 // pred_fallthru
      _
    // Predicated region
    $region6: #{tpu_custom_call.1} parent=1 // pred_check
      _
    $region7: #{tpu_custom_call.1} parent=1 // pred_check_branch
      %26 = sbr.rel (0) target = $region9
    $region8: #{tpu_custom_call.1} parent=1 // pred_region
      _
    $region9: #{tpu_custom_call.1} parent=1 // pred_fallthru
      _
    // Predicated region
    $region10: #{tpu_custom_call.1} parent=1 // pred_check
      _
    $region11: #{tpu_custom_call.1} parent=1 // pred_check_branch
      %28 = sbr.rel (0) target = $region13
    $region12: #{tpu_custom_call.1} parent=1 // pred_region
      _
    $region13: #{tpu_custom_call.1} parent=1 // pred_fallthru
      _
    // Predicated region
    $region14: #{tpu_custom_call.1} parent=1 // pred_check
      _
    $region15: #{tpu_custom_call.1} parent=1 // pred_check_branch
      %30 = sbr.rel (0) target = $region17
    $region16: #{tpu_custom_call.1} parent=1 // pred_region
      _
    $region17: #{tpu_custom_call.1} parent=1 // pred_fallthru
      _
    // Predicated region
    $region18: #{tpu_custom_call.1} parent=1 // pred_check
      _
    $region19: #{tpu_custom_call.1} parent=1 // pred_check_branch
      %32 = sbr.rel (0) target = $region21
    $region20: #{tpu_custom_call.1} parent=1 // pred_region
      _
    $region21: #{tpu_custom_call.1} parent=1 // pred_fallthru
      _
    // Predicated region
    $region22: #{tpu_custom_call.1} parent=1 // pred_check
      _
    $region23: #{tpu_custom_call.1} parent=1 // pred_check_branch
      %34 = sbr.rel (0) target = $region25
    $region24: #{tpu_custom_call.1} parent=1 // pred_region
      _
    $region25: #{tpu_custom_call.1} parent=1 // pred_fallthru
      _
    // Predicated region
    $region26: #{tpu_custom_call.1} parent=1 // pred_check
      _
    $region27: #{tpu_custom_call.1} parent=1 // pred_check_branch
      %36 = sbr.rel (0) target = $region29
    $region28: #{tpu_custom_call.1} parent=1 // pred_region
      _
    $region29: #{tpu_custom_call.1} parent=1 // pred_fallthru
      _
    // Predicated region
    $region30: #{tpu_custom_call.1} parent=1 // pred_check
      _
    $region31: #{tpu_custom_call.1} parent=1 // pred_check_branch
      %38 = sbr.rel (0) target = $region33
    $region32: #{tpu_custom_call.1} parent=1 // pred_region
      _
    $region33: #{tpu_custom_call.1} parent=1 // pred_fallthru
      _
    // Predicated region
    $region34: #{tpu_custom_call.1} parent=1 // pred_check
      _
    $region35: #{tpu_custom_call.1} parent=1 // pred_check_branch
      %40 = sbr.rel (0) target = $region37
    $region36: #{tpu_custom_call.1} parent=1 // pred_region
      _
    $region37: #{tpu_custom_call.1} parent=1 // pred_fallthru
      _
    // Predicated region
    $region38: #{tpu_custom_call.1} parent=1 // pred_check
      _
    $region39: #{tpu_custom_call.1} parent=1 // pred_check_branch
      %42 = sbr.rel (0) target = $region41
    $region40: #{tpu_custom_call.1} parent=1 // pred_region
      _
    $region41: #{tpu_custom_call.1} parent=1 // pred_fallthru
      _
    // Predicated region
    $region42: #{tpu_custom_call.1} parent=1 // pred_check
      _
    $region43: #{tpu_custom_call.1} parent=1 // pred_check_branch
      %44 = sbr.rel (0) target = $region45
    $region44: #{tpu_custom_call.1} parent=1 // pred_region
      _
    $region45: #{tpu_custom_call.1} parent=1 // pred_fallthru
      _
    // Predicated region
    $region46: #{tpu_custom_call.1} parent=1 // pred_check
      _
    $region47: #{tpu_custom_call.1} parent=1 // pred_check_branch
      %46 = sbr.rel (0) target = $region49
    $region48: #{tpu_custom_call.1} parent=1 // pred_region
      _
    $region49: #{tpu_custom_call.1} parent=1 // pred_fallthru
      _
    // Predicated region
    $region50: #{tpu_custom_call.1} parent=1 // pred_check
      _
    $region51: #{tpu_custom_call.1} parent=1 // pred_check_branch
      %48 = sbr.rel (0) target = $region53
    $region52: #{tpu_custom_call.1} parent=1 // pred_region
      _
    $region53: #{tpu_custom_call.1} parent=1 // pred_fallthru
      _
    // Predicated region
    $region54: #{tpu_custom_call.1} parent=1 // pred_check
      _
    $region55: #{tpu_custom_call.1} parent=1 // pred_check_branch
      %50 = sbr.rel (0) target = $region57
    $region56: #{tpu_custom_call.1} parent=1 // pred_region
      _
    $region57: #{tpu_custom_call.1} parent=1 // pred_fallthru
      _
    // Predicated region
    $region58: #{tpu_custom_call.1} parent=1 // pred_check
      _
    $region59: #{tpu_custom_call.1} parent=1 // pred_check_branch
      %52 = sbr.rel (0) target = $region61
    $region60: #{tpu_custom_call.1} parent=1 // pred_region
      _
    $region61: #{tpu_custom_call.1} parent=1 // pred_fallthru
      _
    // Predicated region
    $region62: #{tpu_custom_call.1} parent=1 // pred_check
      _
    $region63: #{tpu_custom_call.1} parent=1 // pred_check_branch
      %54 = sbr.rel (0) target = $region65
    $region64: #{tpu_custom_call.1} parent=1 // pred_region
      _
    $region65: #{tpu_custom_call.1} parent=1 // pred_fallthru
      _
    // Predicated region
    $region66: #{tpu_custom_call.1} parent=1 // pred_check
      _
    $region67: #{tpu_custom_call.1} parent=1 // pred_check_branch
      %56 = sbr.rel (0) target = $region69
    $region68: #{tpu_custom_call.1} parent=1 // pred_region
      _
    $region69: #{tpu_custom_call.1} parent=1 // pred_fallthru
      _
    %v57 = vld [vmem:[%s0] sm:$0xff]
    %v58 = vld [vmem:[%s0 + $0x8] sm:$0xff]
    %v59 = vld [vmem:[%s0 + $0x10] sm:$0xff]
    %v60 = vld [vmem:[%s0 + $0x18] sm:$0xff]
    %v61 = vld [vmem:[%s1] sm:$0xff]
    %v62 = vld [vmem:[%s1 + $0x8] sm:$0xff]
    %v63 = vld [vmem:[%s1 + $0x10] sm:$0xff]
    %v64 = vld [vmem:[%s1 + $0x18] sm:$0xff]
    %v65 = vld [vmem:[%s2] sm:$0xff]
    %v66 = vld [vmem:[%s2 + $0x8] sm:$0xff]
    %v67 = vld [vmem:[%s2 + $0x10] sm:$0xff]
    %v68 = vld [vmem:[%s2 + $0x18] sm:$0xff]
    %70 = vset.pattern.permute.xlu0 0
    %71 = vperm.xlu0 %70, %v65
    %v72 = vpop.permute.xlu0 %71
    %75 = vset.pattern.permute.xlu0 0
    %76 = vperm.xlu0 %75, %v66
    %v77 = vpop.permute.xlu0 %76
    %80 = vset.pattern.permute.xlu0 0
    %81 = vperm.xlu0 %80, %v67
    %v82 = vpop.permute.xlu0 %81
    %85 = vset.pattern.permute.xlu0 0
    %86 = vperm.xlu0 %85, %v68
    %v87 = vpop.permute.xlu0 %86
    %vm89 = vcmask 261120
    %v91 = vsel %vm89, %v61, 0
    %v94 = vsel %vm89, %v62, 0
    %v97 = vsel %vm89, %v63, 0
    %v100 = vsel %vm89, %v64, 0
    %102 = vmatprep.subr.mxu0 0.0
    %103 = vmatpush1.msra.mxu0 %v57
    %104 = vmatprep.subr.mxu0 0.0
    %105 = vmatpush1.msra.mxu0 %v58
    %106 = vmatprep.subr.mxu0 0.0
    %107 = vmatpush1.msra.mxu0 %v59
    %108 = vmatprep.subr.mxu0 0.0
    %109 = vmatpush1.msra.mxu0 %v60
    %110 = vmatprep.subr.mxu0 0.0
    %111 = vmatpush1.msra.mxu0 0.0
    %112 = vmatprep.subr.mxu0 0.0
    %113 = vmatpush1.msra.mxu0 0.0
    %114 = vmatprep.subr.mxu0 0.0
    %115 = vmatpush1.msra.mxu0 0.0
    %116 = vmatprep.subr.mxu0 0.0
    %117 = vmatpush1.msra.mxu0 0.0
    %118 = vmatprep.subr.mxu0 0.0
    %119 = vmatpush1.msra.mxu0 0.0
    %120 = vmatprep.subr.mxu0 0.0
    %121 = vmatpush1.msra.mxu0 0.0
    %122 = vmatprep.subr.mxu0 0.0
    %123 = vmatpush1.msra.mxu0 0.0
    %124 = vmatprep.subr.mxu0 0.0
    %125 = vmatpush1.msra.mxu0 0.0
    %126 = vmatprep.subr.mxu0 0.0
    %127 = vmatpush1.msra.mxu0 0.0
    %128 = vmatprep.subr.mxu0 0.0
    %129 = vmatpush1.msra.mxu0 0.0
    %130 = vmatprep.subr.mxu0 0.0
    %131 = vmatpush1.msra.mxu0 0.0
    %132 = vmatprep.subr.mxu0 0.0
    %133 = vmatpush1.msra.mxu0 0.0
    %134 = vmatprep.subr.mxu0 0.0
    %135 = vmatpush1.msra.mxu0 0.0
    %136 = vmatprep.subr.mxu0 0.0
    %137 = vmatpush1.msra.mxu0 0.0
    %138 = vmatprep.subr.mxu0 0.0
    %139 = vmatpush1.msra.mxu0 0.0
    %140 = vmatprep.subr.mxu0 0.0
    %141 = vmatpush1.msra.mxu0 0.0
    %142 = vmatprep.subr.mxu0 0.0
    %143 = vmatpush1.msra.mxu0 0.0
    %144 = vmatprep.subr.mxu0 0.0
    %145 = vmatpush1.msra.mxu0 0.0
    %146 = vmatprep.subr.mxu0 0.0
    %147 = vmatpush1.msra.mxu0 0.0
    %148 = vmatprep.subr.mxu0 0.0
    %149 = vmatpush1.msra.mxu0 0.0
    %150 = vmatprep.subr.mxu0 0.0
    %151 = vmatpush1.msra.mxu0 0.0
    %152 = vmatprep.subr.mxu0 0.0
    %153 = vmatpush1.msra.mxu0 0.0
    %154 = vmatprep.subr.mxu0 0.0
    %155 = vmatpush1.msra.mxu0 0.0
    %156 = vmatprep.subr.mxu0 0.0
    %157 = vmatpush1.msra.mxu0 0.0
    %158 = vmatprep.subr.mxu0 0.0
    %159 = vmatpush1.msra.mxu0 0.0
    %160 = vmatprep.subr.mxu0 0.0
    %161 = vmatpush1.msra.mxu0 0.0
    %162 = vmatprep.subr.mxu0 0.0
    %163 = vmatpush1.msra.mxu0 0.0
    %164 = vmatprep.subr.mxu0 0.0
    %165 = vmatpush1.msra.mxu0 0.0
    %166 = vmatprep.mubr.f32.mxu0 0.0
    %167 = vmatmul.mubr.f32.gmra.mrb[0].mxu0 %v91
    %v168 = vpop.f32.mrb[0].mxu0
    %v169 = vadd.f32 %v72, %v168
    %v170 = vpop.f32.mrb[0].mxu0
    %171 = vmatprep.mubr.f32.mxu0 0.0
    %172 = vmatmul.mubr.f32.gmra.mrb[0].mxu0 %v94
    %v173 = vpop.f32.mrb[0].mxu0
    %v174 = vadd.f32 %v77, %v173
    %v175 = vpop.f32.mrb[0].mxu0
    %176 = vmatprep.mubr.f32.mxu0 0.0
    %177 = vmatmul.mubr.f32.gmra.mrb[0].mxu0 %v97
    %v178 = vpop.f32.mrb[0].mxu0
    %v179 = vadd.f32 %v82, %v178
    %v180 = vpop.f32.mrb[0].mxu0
    %181 = vmatprep.mubr.f32.mxu0 0.0
    %182 = vmatmul.mubr.f32.gmra.mrb[0].mxu0 %v100
    %v183 = vpop.f32.mrb[0].mxu0
    %v184 = vadd.f32 %v87, %v183
    %v185 = vpop.f32.mrb[0].mxu0
    %186 = vdwg.mxu0
    %vm187 = vcmp.gt.f32.partialorder %v169, 0.0
    %vm188 = vcmp.gt.f32.partialorder %v174, 0.0
    %vm189 = vcmp.gt.f32.partialorder %v179, 0.0
    %vm190 = vcmp.gt.f32.partialorder %v184, 0.0
    %v191 = vmul.f32 %v169, 0.01
    %v192 = vmul.f32 %v174, 0.01
    %v193 = vmul.f32 %v179, 0.01
    %v194 = vmul.f32 %v184, 0.01
    %v195 = vsel %vm187, %v169, %v191
    %v196 = vsel %vm188, %v174, %v192
    %v197 = vsel %vm189, %v179, %v193
    %v198 = vsel %vm190, %v184, %v194
    %v199 = vld [vmem:[%s3] sm:$0xff]
    %v200 = vld [vmem:[%s3 + $0x8] sm:$0xff]
    %v201 = vld [vmem:[%s4] sm:$0xff]
    %v202 = vld [vmem:[%s4 + $0x8] sm:$0xff]
    %204 = vset.pattern.permute.xlu0 0
    %205 = vperm.xlu0 %204, %v201
    %v206 = vpop.permute.xlu0 %205
    %209 = vset.pattern.permute.xlu0 0
    %210 = vperm.xlu0 %209, %v202
    %v211 = vpop.permute.xlu0 %210
    %v214 = vsel %vm89, %v199, 0
    %v217 = vsel %vm89, %v200, 0
    %219 = vmatprep.subr.mxu0 0.0
    %220 = vmatpush1.msra.mxu0 %v195
    %221 = vmatprep.subr.mxu0 0.0
    %222 = vmatpush1.msra.mxu0 %v196
    %223 = vmatprep.subr.mxu0 0.0
    %224 = vmatpush1.msra.mxu0 %v197
    %225 = vmatprep.subr.mxu0 0.0
    %226 = vmatpush1.msra.mxu0 %v198
    %227 = vmatprep.subr.mxu0 0.0
    %228 = vmatpush1.msra.mxu0 0.0
    %229 = vmatprep.subr.mxu0 0.0
    %230 = vmatpush1.msra.mxu0 0.0
    %231 = vmatprep.subr.mxu0 0.0
    %232 = vmatpush1.msra.mxu0 0.0
    %233 = vmatprep.subr.mxu0 0.0
    %234 = vmatpush1.msra.mxu0 0.0
    %235 = vmatprep.subr.mxu0 0.0
    %236 = vmatpush1.msra.mxu0 0.0
    %237 = vmatprep.subr.mxu0 0.0
    %238 = vmatpush1.msra.mxu0 0.0
    %239 = vmatprep.subr.mxu0 0.0
    %240 = vmatpush1.msra.mxu0 0.0
    %241 = vmatprep.subr.mxu0 0.0
    %242 = vmatpush1.msra.mxu0 0.0
    %243 = vmatprep.subr.mxu0 0.0
    %244 = vmatpush1.msra.mxu0 0.0
    %245 = vmatprep.subr.mxu0 0.0
    %246 = vmatpush1.msra.mxu0 0.0
    %247 = vmatprep.subr.mxu0 0.0
    %248 = vmatpush1.msra.mxu0 0.0
    %249 = vmatprep.subr.mxu0 0.0
    %250 = vmatpush1.msra.mxu0 0.0
    %251 = vmatprep.subr.mxu0 0.0
    %252 = vmatpush1.msra.mxu0 0.0
    %253 = vmatprep.subr.mxu0 0.0
    %254 = vmatpush1.msra.mxu0 0.0
    %255 = vmatprep.subr.mxu0 0.0
    %256 = vmatpush1.msra.mxu0 0.0
    %257 = vmatprep.subr.mxu0 0.0
    %258 = vmatpush1.msra.mxu0 0.0
    %259 = vmatprep.subr.mxu0 0.0
    %260 = vmatpush1.msra.mxu0 0.0
    %261 = vmatprep.subr.mxu0 0.0
    %262 = vmatpush1.msra.mxu0 0.0
    %263 = vmatprep.subr.mxu0 0.0
    %264 = vmatpush1.msra.mxu0 0.0
    %265 = vmatprep.subr.mxu0 0.0
    %266 = vmatpush1.msra.mxu0 0.0
    %267 = vmatprep.subr.mxu0 0.0
    %268 = vmatpush1.msra.mxu0 0.0
    %269 = vmatprep.subr.mxu0 0.0
    %270 = vmatpush1.msra.mxu0 0.0
    %271 = vmatprep.subr.mxu0 0.0
    %272 = vmatpush1.msra.mxu0 0.0
    %273 = vmatprep.subr.mxu0 0.0
    %274 = vmatpush1.msra.mxu0 0.0
    %275 = vmatprep.subr.mxu0 0.0
    %276 = vmatpush1.msra.mxu0 0.0
    %277 = vmatprep.subr.mxu0 0.0
    %278 = vmatpush1.msra.mxu0 0.0
    %279 = vmatprep.subr.mxu0 0.0
    %280 = vmatpush1.msra.mxu0 0.0
    %281 = vmatprep.subr.mxu0 0.0
    %282 = vmatpush1.msra.mxu0 0.0
    %283 = vmatprep.mubr.f32.mxu0 0.0
    %284 = vmatmul.mubr.f32.gmra.mrb[0].mxu0 %v214
    %v285 = vpop.f32.mrb[0].mxu0
    %v286 = vadd.f32 %v206, %v285
    %v287 = vpop.f32.mrb[0].mxu0
    %288 = vmatprep.mubr.f32.mxu0 0.0
    %289 = vmatmul.mubr.f32.gmra.mrb[0].mxu0 %v217
    %v290 = vpop.f32.mrb[0].mxu0
    %v291 = vadd.f32 %v211, %v290
    %v292 = vpop.f32.mrb[0].mxu0
    %293 = vdwg.mxu0
    %vm294 = vcmp.gt.f32.partialorder %v286, 0.0
    %vm295 = vcmp.gt.f32.partialorder %v291, 0.0
    %v296 = vmul.f32 %v286, 0.01
    %v297 = vmul.f32 %v291, 0.01
    %v298 = vsel %vm294, %v286, %v296
    %v299 = vsel %vm295, %v291, %v297
    %v300 = vld [vmem:[%s5] sm:$0xff]
    %v301 = vld [vmem:[%s6] sm:$0xff]
    %303 = vset.pattern.permute.xlu0 0
    %304 = vperm.xlu0 %303, %v301
    %v305 = vpop.permute.xlu0 %304
    %vm307 = vcmask 130048
    %v309 = vsel %vm307, %v300, 0
    %311 = vmatprep.subr.mxu0 0.0
    %312 = vmatpush1.msra.mxu0 %v298
    %313 = vmatprep.subr.mxu0 0.0
    %314 = vmatpush1.msra.mxu0 %v299
    %315 = vmatprep.subr.mxu0 0.0
    %316 = vmatpush1.msra.mxu0 0.0
    %317 = vmatprep.subr.mxu0 0.0
    %318 = vmatpush1.msra.mxu0 0.0
    %319 = vmatprep.subr.mxu0 0.0
    %320 = vmatpush1.msra.mxu0 0.0
    %321 = vmatprep.subr.mxu0 0.0
    %322 = vmatpush1.msra.mxu0 0.0
    %323 = vmatprep.subr.mxu0 0.0
    %324 = vmatpush1.msra.mxu0 0.0
    %325 = vmatprep.subr.mxu0 0.0
    %326 = vmatpush1.msra.mxu0 0.0
    %327 = vmatprep.subr.mxu0 0.0
    %328 = vmatpush1.msra.mxu0 0.0
    %329 = vmatprep.subr.mxu0 0.0
    %330 = vmatpush1.msra.mxu0 0.0
    %331 = vmatprep.subr.mxu0 0.0
    %332 = vmatpush1.msra.mxu0 0.0
    %333 = vmatprep.subr.mxu0 0.0
    %334 = vmatpush1.msra.mxu0 0.0
    %335 = vmatprep.subr.mxu0 0.0
    %336 = vmatpush1.msra.mxu0 0.0
    %337 = vmatprep.subr.mxu0 0.0
    %338 = vmatpush1.msra.mxu0 0.0
    %339 = vmatprep.subr.mxu0 0.0
    %340 = vmatpush1.msra.mxu0 0.0
    %341 = vmatprep.subr.mxu0 0.0
    %342 = vmatpush1.msra.mxu0 0.0
    %343 = vmatprep.subr.mxu0 0.0
    %344 = vmatpush1.msra.mxu0 0.0
    %345 = vmatprep.subr.mxu0 0.0
    %346 = vmatpush1.msra.mxu0 0.0
    %347 = vmatprep.subr.mxu0 0.0
    %348 = vmatpush1.msra.mxu0 0.0
    %349 = vmatprep.subr.mxu0 0.0
    %350 = vmatpush1.msra.mxu0 0.0
    %351 = vmatprep.subr.mxu0 0.0
    %352 = vmatpush1.msra.mxu0 0.0
    %353 = vmatprep.subr.mxu0 0.0
    %354 = vmatpush1.msra.mxu0 0.0
    %355 = vmatprep.subr.mxu0 0.0
    %356 = vmatpush1.msra.mxu0 0.0
    %357 = vmatprep.subr.mxu0 0.0
    %358 = vmatpush1.msra.mxu0 0.0
    %359 = vmatprep.subr.mxu0 0.0
    %360 = vmatpush1.msra.mxu0 0.0
    %361 = vmatprep.subr.mxu0 0.0
    %362 = vmatpush1.msra.mxu0 0.0
    %363 = vmatprep.subr.mxu0 0.0
    %364 = vmatpush1.msra.mxu0 0.0
    %365 = vmatprep.subr.mxu0 0.0
    %366 = vmatpush1.msra.mxu0 0.0
    %367 = vmatprep.subr.mxu0 0.0
    %368 = vmatpush1.msra.mxu0 0.0
    %369 = vmatprep.subr.mxu0 0.0
    %370 = vmatpush1.msra.mxu0 0.0
    %371 = vmatprep.subr.mxu0 0.0
    %372 = vmatpush1.msra.mxu0 0.0
    %373 = vmatprep.subr.mxu0 0.0
    %374 = vmatpush1.msra.mxu0 0.0
    %375 = vmatprep.mubr.f32.mxu0 0.0
    %376 = vmatmul.mubr.f32.gmra.mrb[0].mxu0 %v309
    %v377 = vpop.f32.mrb[0].mxu0
    %v378 = vadd.f32 %v305, %v377
    %v379 = vpop.f32.mrb[0].mxu0
    %380 = vdwg.mxu0
    %vm381 = vcmp.gt.f32.partialorder %v378, 0.0
    %v382 = vmul.f32 %v378, 0.01
    %v383 = vsel %vm381, %v378, %v382
    %v384 = vld [vmem:[%s7] sm:$0xff]
    %v385 = vld [vmem:[%s8] sm:$0xff]
    %387 = vset.pattern.permute.xlu0 0
    %388 = vperm.xlu0 %387, %v385
    %v389 = vpop.permute.xlu0 %388
    %vm391 = vcmask 64512
    %v393 = vsel %vm391, %v384, 0
    %395 = vmatprep.subr.mxu0 0.0
    %396 = vmatpush1.msra.mxu0 %v383
    %397 = vmatprep.subr.mxu0 0.0
    %398 = vmatpush1.msra.mxu0 0.0
    %399 = vmatprep.subr.mxu0 0.0
    %400 = vmatpush1.msra.mxu0 0.0
    %401 = vmatprep.subr.mxu0 0.0
    %402 = vmatpush1.msra.mxu0 0.0
    %403 = vmatprep.subr.mxu0 0.0
    %404 = vmatpush1.msra.mxu0 0.0
    %405 = vmatprep.subr.mxu0 0.0
    %406 = vmatpush1.msra.mxu0 0.0
    %407 = vmatprep.subr.mxu0 0.0
    %408 = vmatpush1.msra.mxu0 0.0
    %409 = vmatprep.subr.mxu0 0.0
    %410 = vmatpush1.msra.mxu0 0.0
    %411 = vmatprep.subr.mxu0 0.0
    %412 = vmatpush1.msra.mxu0 0.0
    %413 = vmatprep.subr.mxu0 0.0
    %414 = vmatpush1.msra.mxu0 0.0
    %415 = vmatprep.subr.mxu0 0.0
    %416 = vmatpush1.msra.mxu0 0.0
    %417 = vmatprep.subr.mxu0 0.0
    %418 = vmatpush1.msra.mxu0 0.0
    %419 = vmatprep.subr.mxu0 0.0
    %420 = vmatpush1.msra.mxu0 0.0
    %421 = vmatprep.subr.mxu0 0.0
    %422 = vmatpush1.msra.mxu0 0.0
    %423 = vmatprep.subr.mxu0 0.0
    %424 = vmatpush1.msra.mxu0 0.0
    %425 = vmatprep.subr.mxu0 0.0
    %426 = vmatpush1.msra.mxu0 0.0
    %427 = vmatprep.subr.mxu0 0.0
    %428 = vmatpush1.msra.mxu0 0.0
    %429 = vmatprep.subr.mxu0 0.0
    %430 = vmatpush1.msra.mxu0 0.0
    %431 = vmatprep.subr.mxu0 0.0
    %432 = vmatpush1.msra.mxu0 0.0
    %433 = vmatprep.subr.mxu0 0.0
    %434 = vmatpush1.msra.mxu0 0.0
    %435 = vmatprep.subr.mxu0 0.0
    %436 = vmatpush1.msra.mxu0 0.0
    %437 = vmatprep.subr.mxu0 0.0
    %438 = vmatpush1.msra.mxu0 0.0
    %439 = vmatprep.subr.mxu0 0.0
    %440 = vmatpush1.msra.mxu0 0.0
    %441 = vmatprep.subr.mxu0 0.0
    %442 = vmatpush1.msra.mxu0 0.0
    %443 = vmatprep.subr.mxu0 0.0
    %444 = vmatpush1.msra.mxu0 0.0
    %445 = vmatprep.subr.mxu0 0.0
    %446 = vmatpush1.msra.mxu0 0.0
    %447 = vmatprep.subr.mxu0 0.0
    %448 = vmatpush1.msra.mxu0 0.0
    %449 = vmatprep.subr.mxu0 0.0
    %450 = vmatpush1.msra.mxu0 0.0
    %451 = vmatprep.subr.mxu0 0.0
    %452 = vmatpush1.msra.mxu0 0.0
    %453 = vmatprep.subr.mxu0 0.0
    %454 = vmatpush1.msra.mxu0 0.0
    %455 = vmatprep.subr.mxu0 0.0
    %456 = vmatpush1.msra.mxu0 0.0
    %457 = vmatprep.subr.mxu0 0.0
    %458 = vmatpush1.msra.mxu0 0.0
    %459 = vmatprep.mubr.f32.mxu0 0.0
    %460 = vmatmul.mubr.f32.gmra.mrb[0].mxu0 %v393
    %v461 = vpop.f32.mrb[0].mxu0
    %v462 = vadd.f32 %v389, %v461
    %v463 = vpop.f32.mrb[0].mxu0
    %464 = vdwg.mxu0
    %vm465 = vcmp.gt.f32.partialorder %v462, 0.0
    %v466 = vmul.f32 %v462, 0.01
    %v467 = vsel %vm465, %v462, %v466
    %v468 = vld [vmem:[%s9] sm:$0xff]
    %v469 = vld [vmem:[%s10] sm:$0xff]
    %471 = vset.pattern.permute.xlu0 0
    %472 = vperm.xlu0 %471, %v469
    %v473 = vpop.permute.xlu0 %472
    %v476 = vsel %vm391, %v468, 0
    %478 = vmatprep.subr.mxu0 0.0
    %479 = vmatpush1.msra.mxu0 %v467
    %480 = vmatprep.subr.mxu0 0.0
    %481 = vmatpush1.msra.mxu0 0.0
    %482 = vmatprep.subr.mxu0 0.0
    %483 = vmatpush1.msra.mxu0 0.0
    %484 = vmatprep.subr.mxu0 0.0
    %485 = vmatpush1.msra.mxu0 0.0
    %486 = vmatprep.subr.mxu0 0.0
    %487 = vmatpush1.msra.mxu0 0.0
    %488 = vmatprep.subr.mxu0 0.0
    %489 = vmatpush1.msra.mxu0 0.0
    %490 = vmatprep.subr.mxu0 0.0
    %491 = vmatpush1.msra.mxu0 0.0
    %492 = vmatprep.subr.mxu0 0.0
    %493 = vmatpush1.msra.mxu0 0.0
    %494 = vmatprep.subr.mxu0 0.0
    %495 = vmatpush1.msra.mxu0 0.0
    %496 = vmatprep.subr.mxu0 0.0
    %497 = vmatpush1.msra.mxu0 0.0
    %498 = vmatprep.subr.mxu0 0.0
    %499 = vmatpush1.msra.mxu0 0.0
    %500 = vmatprep.subr.mxu0 0.0
    %501 = vmatpush1.msra.mxu0 0.0
    %502 = vmatprep.subr.mxu0 0.0
    %503 = vmatpush1.msra.mxu0 0.0
    %504 = vmatprep.subr.mxu0 0.0
    %505 = vmatpush1.msra.mxu0 0.0
    %506 = vmatprep.subr.mxu0 0.0
    %507 = vmatpush1.msra.mxu0 0.0
    %508 = vmatprep.subr.mxu0 0.0
    %509 = vmatpush1.msra.mxu0 0.0
    %510 = vmatprep.subr.mxu0 0.0
    %511 = vmatpush1.msra.mxu0 0.0
    %512 = vmatprep.subr.mxu0 0.0
    %513 = vmatpush1.msra.mxu0 0.0
    %514 = vmatprep.subr.mxu0 0.0
    %515 = vmatpush1.msra.mxu0 0.0
    %516 = vmatprep.subr.mxu0 0.0
    %517 = vmatpush1.msra.mxu0 0.0
    %518 = vmatprep.subr.mxu0 0.0
    %519 = vmatpush1.msra.mxu0 0.0
    %520 = vmatprep.subr.mxu0 0.0
    %521 = vmatpush1.msra.mxu0 0.0
    %522 = vmatprep.subr.mxu0 0.0
    %523 = vmatpush1.msra.mxu0 0.0
    %524 = vmatprep.subr.mxu0 0.0
    %525 = vmatpush1.msra.mxu0 0.0
    %526 = vmatprep.subr.mxu0 0.0
    %527 = vmatpush1.msra.mxu0 0.0
    %528 = vmatprep.subr.mxu0 0.0
    %529 = vmatpush1.msra.mxu0 0.0
    %530 = vmatprep.subr.mxu0 0.0
    %531 = vmatpush1.msra.mxu0 0.0
    %532 = vmatprep.subr.mxu0 0.0
    %533 = vmatpush1.msra.mxu0 0.0
    %534 = vmatprep.subr.mxu0 0.0
    %535 = vmatpush1.msra.mxu0 0.0
    %536 = vmatprep.subr.mxu0 0.0
    %537 = vmatpush1.msra.mxu0 0.0
    %538 = vmatprep.subr.mxu0 0.0
    %539 = vmatpush1.msra.mxu0 0.0
    %540 = vmatprep.subr.mxu0 0.0
    %541 = vmatpush1.msra.mxu0 0.0
    %542 = vmatprep.mubr.f32.mxu0 0.0
    %543 = vmatmul.mubr.f32.gmra.mrb[0].mxu0 %v476
    %v544 = vpop.f32.mrb[0].mxu0
    %v545 = vadd.f32 %v473, %v544
    %v546 = vpop.f32.mrb[0].mxu0
    %547 = vdwg.mxu0
    %vm548 = vcmp.gt.f32.partialorder %v545, 0.0
    %v549 = vmul.f32 %v545, 0.01
    %v550 = vsel %vm548, %v545, %v549
    %v551 = vld [vmem:[%s11] sm:$0xff]
    %v552 = vld [vmem:[%s11 + $0x8] sm:$0xff]
    %v553 = vld [vmem:[%s12] sm:$0xff]
    %v554 = vld [vmem:[%s12 + $0x8] sm:$0xff]
    %556 = vset.pattern.permute.xlu0 0
    %557 = vperm.xlu0 %556, %v553
    %v558 = vpop.permute.xlu0 %557
    %561 = vset.pattern.permute.xlu0 0
    %562 = vperm.xlu0 %561, %v554
    %v563 = vpop.permute.xlu0 %562
    %v566 = vsel %vm391, %v551, 0
    %v569 = vsel %vm391, %v552, 0
    %571 = vmatprep.subr.mxu0 0.0
    %572 = vmatpush1.msra.mxu0 %v550
    %573 = vmatprep.subr.mxu0 0.0
    %574 = vmatpush1.msra.mxu0 0.0
    %575 = vmatprep.subr.mxu0 0.0
    %576 = vmatpush1.msra.mxu0 0.0
    %577 = vmatprep.subr.mxu0 0.0
    %578 = vmatpush1.msra.mxu0 0.0
    %579 = vmatprep.subr.mxu0 0.0
    %580 = vmatpush1.msra.mxu0 0.0
    %581 = vmatprep.subr.mxu0 0.0
    %582 = vmatpush1.msra.mxu0 0.0
    %583 = vmatprep.subr.mxu0 0.0
    %584 = vmatpush1.msra.mxu0 0.0
    %585 = vmatprep.subr.mxu0 0.0
    %586 = vmatpush1.msra.mxu0 0.0
    %587 = vmatprep.subr.mxu0 0.0
    %588 = vmatpush1.msra.mxu0 0.0
    %589 = vmatprep.subr.mxu0 0.0
    %590 = vmatpush1.msra.mxu0 0.0
    %591 = vmatprep.subr.mxu0 0.0
    %592 = vmatpush1.msra.mxu0 0.0
    %593 = vmatprep.subr.mxu0 0.0
    %594 = vmatpush1.msra.mxu0 0.0
    %595 = vmatprep.subr.mxu0 0.0
    %596 = vmatpush1.msra.mxu0 0.0
    %597 = vmatprep.subr.mxu0 0.0
    %598 = vmatpush1.msra.mxu0 0.0
    %599 = vmatprep.subr.mxu0 0.0
    %600 = vmatpush1.msra.mxu0 0.0
    %601 = vmatprep.subr.mxu0 0.0
    %602 = vmatpush1.msra.mxu0 0.0
    %603 = vmatprep.subr.mxu0 0.0
    %604 = vmatpush1.msra.mxu0 0.0
    %605 = vmatprep.subr.mxu0 0.0
    %606 = vmatpush1.msra.mxu0 0.0
    %607 = vmatprep.subr.mxu0 0.0
    %608 = vmatpush1.msra.mxu0 0.0
    %609 = vmatprep.subr.mxu0 0.0
    %610 = vmatpush1.msra.mxu0 0.0
    %611 = vmatprep.subr.mxu0 0.0
    %612 = vmatpush1.msra.mxu0 0.0
    %613 = vmatprep.subr.mxu0 0.0
    %614 = vmatpush1.msra.mxu0 0.0
    %615 = vmatprep.subr.mxu0 0.0
    %616 = vmatpush1.msra.mxu0 0.0
    %617 = vmatprep.subr.mxu0 0.0
    %618 = vmatpush1.msra.mxu0 0.0
    %619 = vmatprep.subr.mxu0 0.0
    %620 = vmatpush1.msra.mxu0 0.0
    %621 = vmatprep.subr.mxu0 0.0
    %622 = vmatpush1.msra.mxu0 0.0
    %623 = vmatprep.subr.mxu0 0.0
    %624 = vmatpush1.msra.mxu0 0.0
    %625 = vmatprep.subr.mxu0 0.0
    %626 = vmatpush1.msra.mxu0 0.0
    %627 = vmatprep.subr.mxu0 0.0
    %628 = vmatpush1.msra.mxu0 0.0
    %629 = vmatprep.subr.mxu0 0.0
    %630 = vmatpush1.msra.mxu0 0.0
    %631 = vmatprep.subr.mxu0 0.0
    %632 = vmatpush1.msra.mxu0 0.0
    %633 = vmatprep.subr.mxu0 0.0
    %634 = vmatpush1.msra.mxu0 0.0
    %635 = vmatprep.mubr.f32.mxu0 0.0
    %636 = vmatmul.mubr.f32.gmra.mrb[0].mxu0 %v566
    %v637 = vpop.f32.mrb[0].mxu0
    %v638 = vadd.f32 %v558, %v637
    %v639 = vpop.f32.mrb[0].mxu0
    %640 = vmatprep.mubr.f32.mxu0 0.0
    %641 = vmatmul.mubr.f32.gmra.mrb[0].mxu0 %v569
    %v642 = vpop.f32.mrb[0].mxu0
    %v643 = vadd.f32 %v563, %v642
    %v644 = vpop.f32.mrb[0].mxu0
    %645 = vdwg.mxu0
    %vm646 = vcmp.gt.f32.partialorder %v638, 0.0
    %vm647 = vcmp.gt.f32.partialorder %v643, 0.0
    %v648 = vmul.f32 %v638, 0.01
    %v649 = vmul.f32 %v643, 0.01
    %v650 = vsel %vm646, %v638, %v648
    %v651 = vsel %vm647, %v643, %v649
    %v652 = vld [vmem:[%s13] sm:$0xff]
    %v653 = vld [vmem:[%s13 + $0x8] sm:$0xff]
    %v654 = vld [vmem:[%s13 + $0x10] sm:$0xff]
    %v655 = vld [vmem:[%s13 + $0x18] sm:$0xff]
    %v656 = vld [vmem:[%s14] sm:$0xff]
    %v657 = vld [vmem:[%s14 + $0x8] sm:$0xff]
    %v658 = vld [vmem:[%s14 + $0x10] sm:$0xff]
    %v659 = vld [vmem:[%s14 + $0x18] sm:$0xff]
    %661 = vset.pattern.permute.xlu0 0
    %662 = vperm.xlu0 %661, %v656
    %v663 = vpop.permute.xlu0 %662
    %666 = vset.pattern.permute.xlu0 0
    %667 = vperm.xlu0 %666, %v657
    %v668 = vpop.permute.xlu0 %667
    %671 = vset.pattern.permute.xlu0 0
    %672 = vperm.xlu0 %671, %v658
    %v673 = vpop.permute.xlu0 %672
    %676 = vset.pattern.permute.xlu0 0
    %677 = vperm.xlu0 %676, %v659
    %v678 = vpop.permute.xlu0 %677
    %v681 = vsel %vm307, %v652, 0
    %v684 = vsel %vm307, %v653, 0
    %v687 = vsel %vm307, %v654, 0
    %v690 = vsel %vm307, %v655, 0
    %692 = vmatprep.subr.mxu0 0.0
    %693 = vmatpush1.msra.mxu0 %v650
    %694 = vmatprep.subr.mxu0 0.0
    %695 = vmatpush1.msra.mxu0 %v651
    %696 = vmatprep.subr.mxu0 0.0
    %697 = vmatpush1.msra.mxu0 0.0
    %698 = vmatprep.subr.mxu0 0.0
    %699 = vmatpush1.msra.mxu0 0.0
    %700 = vmatprep.subr.mxu0 0.0
    %701 = vmatpush1.msra.mxu0 0.0
    %702 = vmatprep.subr.mxu0 0.0
    %703 = vmatpush1.msra.mxu0 0.0
    %704 = vmatprep.subr.mxu0 0.0
    %705 = vmatpush1.msra.mxu0 0.0
    %706 = vmatprep.subr.mxu0 0.0
    %707 = vmatpush1.msra.mxu0 0.0
    %708 = vmatprep.subr.mxu0 0.0
    %709 = vmatpush1.msra.mxu0 0.0
    %710 = vmatprep.subr.mxu0 0.0
    %711 = vmatpush1.msra.mxu0 0.0
    %712 = vmatprep.subr.mxu0 0.0
    %713 = vmatpush1.msra.mxu0 0.0
    %714 = vmatprep.subr.mxu0 0.0
    %715 = vmatpush1.msra.mxu0 0.0
    %716 = vmatprep.subr.mxu0 0.0
    %717 = vmatpush1.msra.mxu0 0.0
    %718 = vmatprep.subr.mxu0 0.0
    %719 = vmatpush1.msra.mxu0 0.0
    %720 = vmatprep.subr.mxu0 0.0
    %721 = vmatpush1.msra.mxu0 0.0
    %722 = vmatprep.subr.mxu0 0.0
    %723 = vmatpush1.msra.mxu0 0.0
    %724 = vmatprep.subr.mxu0 0.0
    %725 = vmatpush1.msra.mxu0 0.0
    %726 = vmatprep.subr.mxu0 0.0
    %727 = vmatpush1.msra.mxu0 0.0
    %728 = vmatprep.subr.mxu0 0.0
    %729 = vmatpush1.msra.mxu0 0.0
    %730 = vmatprep.subr.mxu0 0.0
    %731 = vmatpush1.msra.mxu0 0.0
    %732 = vmatprep.subr.mxu0 0.0
    %733 = vmatpush1.msra.mxu0 0.0
    %734 = vmatprep.subr.mxu0 0.0
    %735 = vmatpush1.msra.mxu0 0.0
    %736 = vmatprep.subr.mxu0 0.0
    %737 = vmatpush1.msra.mxu0 0.0
    %738 = vmatprep.subr.mxu0 0.0
    %739 = vmatpush1.msra.mxu0 0.0
    %740 = vmatprep.subr.mxu0 0.0
    %741 = vmatpush1.msra.mxu0 0.0
    %742 = vmatprep.subr.mxu0 0.0
    %743 = vmatpush1.msra.mxu0 0.0
    %744 = vmatprep.subr.mxu0 0.0
    %745 = vmatpush1.msra.mxu0 0.0
    %746 = vmatprep.subr.mxu0 0.0
    %747 = vmatpush1.msra.mxu0 0.0
    %748 = vmatprep.subr.mxu0 0.0
    %749 = vmatpush1.msra.mxu0 0.0
    %750 = vmatprep.subr.mxu0 0.0
    %751 = vmatpush1.msra.mxu0 0.0
    %752 = vmatprep.subr.mxu0 0.0
    %753 = vmatpush1.msra.mxu0 0.0
    %754 = vmatprep.subr.mxu0 0.0
    %755 = vmatpush1.msra.mxu0 0.0
    %756 = vmatprep.mubr.f32.mxu0 0.0
    %757 = vmatmul.mubr.f32.gmra.mrb[0].mxu0 %v681
    %v758 = vpop.f32.mrb[0].mxu0
    %v759 = vadd.f32 %v663, %v758
    %v760 = vpop.f32.mrb[0].mxu0
    %761 = vmatprep.mubr.f32.mxu0 0.0
    %762 = vmatmul.mubr.f32.gmra.mrb[0].mxu0 %v684
    %v763 = vpop.f32.mrb[0].mxu0
    %v764 = vadd.f32 %v668, %v763
    %v765 = vpop.f32.mrb[0].mxu0
    %766 = vmatprep.mubr.f32.mxu0 0.0
    %767 = vmatmul.mubr.f32.gmra.mrb[0].mxu0 %v687
    %v768 = vpop.f32.mrb[0].mxu0
    %v769 = vadd.f32 %v673, %v768
    %v770 = vpop.f32.mrb[0].mxu0
    %771 = vmatprep.mubr.f32.mxu0 0.0
    %772 = vmatmul.mubr.f32.gmra.mrb[0].mxu0 %v690
    %v773 = vpop.f32.mrb[0].mxu0
    %v774 = vadd.f32 %v678, %v773
    %v775 = vpop.f32.mrb[0].mxu0
    %776 = vdwg.mxu0
    %vm777 = vcmp.gt.f32.partialorder %v759, 0.0
    %vm778 = vcmp.gt.f32.partialorder %v764, 0.0
    %vm779 = vcmp.gt.f32.partialorder %v769, 0.0
    %vm780 = vcmp.gt.f32.partialorder %v774, 0.0
    %v781 = vmul.f32 %v759, 0.01
    %v782 = vmul.f32 %v764, 0.01
    %v783 = vmul.f32 %v769, 0.01
    %v784 = vmul.f32 %v774, 0.01
    %v785 = vsel %vm777, %v759, %v781
    %v786 = vsel %vm778, %v764, %v782
    %v787 = vsel %vm779, %v769, %v783
    %v788 = vsel %vm780, %v774, %v784
    %v789 = vld [vmem:[%s15] sm:$0xff]
    %v790 = vld [vmem:[%s15 + $0x8] sm:$0xff]
    %v791 = vld [vmem:[%s15 + $0x10] sm:$0xff]
    %v792 = vld [vmem:[%s15 + $0x18] sm:$0xff]
    %v793 = vld [vmem:[%s16] sm:$0xff]
    %v794 = vld [vmem:[%s16 + $0x8] sm:$0xff]
    %v795 = vld [vmem:[%s16 + $0x10] sm:$0xff]
    %v796 = vld [vmem:[%s16 + $0x18] sm:$0xff]
    %798 = vset.pattern.permute.xlu0 0
    %799 = vperm.xlu0 %798, %v793
    %v800 = vpop.permute.xlu0 %799
    %803 = vset.pattern.permute.xlu0 0
    %804 = vperm.xlu0 %803, %v794
    %v805 = vpop.permute.xlu0 %804
    %808 = vset.pattern.permute.xlu0 0
    %809 = vperm.xlu0 %808, %v795
    %v810 = vpop.permute.xlu0 %809
    %813 = vset.pattern.permute.xlu0 0
    %814 = vperm.xlu0 %813, %v796
    %v815 = vpop.permute.xlu0 %814
    %v818 = vsel %vm89, %v789, 0
    %v821 = vsel %vm89, %v790, 0
    %v824 = vsel %vm89, %v791, 0
    %v827 = vsel %vm89, %v792, 0
    %829 = vmatprep.subr.mxu0 0.0
    %830 = vmatpush1.msra.mxu0 %v785
    %831 = vmatprep.subr.mxu0 0.0
    %832 = vmatpush1.msra.mxu0 %v786
    %833 = vmatprep.subr.mxu0 0.0
    %834 = vmatpush1.msra.mxu0 %v787
    %835 = vmatprep.subr.mxu0 0.0
    %836 = vmatpush1.msra.mxu0 %v788
    %837 = vmatprep.subr.mxu0 0.0
    %838 = vmatpush1.msra.mxu0 0.0
    %839 = vmatprep.subr.mxu0 0.0
    %840 = vmatpush1.msra.mxu0 0.0
    %841 = vmatprep.subr.mxu0 0.0
    %842 = vmatpush1.msra.mxu0 0.0
    %843 = vmatprep.subr.mxu0 0.0
    %844 = vmatpush1.msra.mxu0 0.0
    %845 = vmatprep.subr.mxu0 0.0
    %846 = vmatpush1.msra.mxu0 0.0
    %847 = vmatprep.subr.mxu0 0.0
    %848 = vmatpush1.msra.mxu0 0.0
    %849 = vmatprep.subr.mxu0 0.0
    %850 = vmatpush1.msra.mxu0 0.0
    %851 = vmatprep.subr.mxu0 0.0
    %852 = vmatpush1.msra.mxu0 0.0
    %853 = vmatprep.subr.mxu0 0.0
    %854 = vmatpush1.msra.mxu0 0.0
    %855 = vmatprep.subr.mxu0 0.0
    %856 = vmatpush1.msra.mxu0 0.0
    %857 = vmatprep.subr.mxu0 0.0
    %858 = vmatpush1.msra.mxu0 0.0
    %859 = vmatprep.subr.mxu0 0.0
    %860 = vmatpush1.msra.mxu0 0.0
    %861 = vmatprep.subr.mxu0 0.0
    %862 = vmatpush1.msra.mxu0 0.0
    %863 = vmatprep.subr.mxu0 0.0
    %864 = vmatpush1.msra.mxu0 0.0
    %865 = vmatprep.subr.mxu0 0.0
    %866 = vmatpush1.msra.mxu0 0.0
    %867 = vmatprep.subr.mxu0 0.0
    %868 = vmatpush1.msra.mxu0 0.0
    %869 = vmatprep.subr.mxu0 0.0
    %870 = vmatpush1.msra.mxu0 0.0
    %871 = vmatprep.subr.mxu0 0.0
    %872 = vmatpush1.msra.mxu0 0.0
    %873 = vmatprep.subr.mxu0 0.0
    %874 = vmatpush1.msra.mxu0 0.0
    %875 = vmatprep.subr.mxu0 0.0
    %876 = vmatpush1.msra.mxu0 0.0
    %877 = vmatprep.subr.mxu0 0.0
    %878 = vmatpush1.msra.mxu0 0.0
    %879 = vmatprep.subr.mxu0 0.0
    %880 = vmatpush1.msra.mxu0 0.0
    %881 = vmatprep.subr.mxu0 0.0
    %882 = vmatpush1.msra.mxu0 0.0
    %883 = vmatprep.subr.mxu0 0.0
    %884 = vmatpush1.msra.mxu0 0.0
    %885 = vmatprep.subr.mxu0 0.0
    %886 = vmatpush1.msra.mxu0 0.0
    %887 = vmatprep.subr.mxu0 0.0
    %888 = vmatpush1.msra.mxu0 0.0
    %889 = vmatprep.subr.mxu0 0.0
    %890 = vmatpush1.msra.mxu0 0.0
    %891 = vmatprep.subr.mxu0 0.0
    %892 = vmatpush1.msra.mxu0 0.0
    %893 = vmatprep.mubr.f32.mxu0 0.0
    %894 = vmatmul.mubr.f32.gmra.mrb[0].mxu0 %v818
    %v895 = vpop.f32.mrb[0].mxu0
    %v896 = vadd.f32 %v800, %v895
    %v897 = vpop.f32.mrb[0].mxu0
    %898 = vmatprep.mubr.f32.mxu0 0.0
    %899 = vmatmul.mubr.f32.gmra.mrb[0].mxu0 %v821
    %v900 = vpop.f32.mrb[0].mxu0
    %v901 = vadd.f32 %v805, %v900
    %v902 = vpop.f32.mrb[0].mxu0
    %903 = vmatprep.mubr.f32.mxu0 0.0
    %904 = vmatmul.mubr.f32.gmra.mrb[0].mxu0 %v824
    %v905 = vpop.f32.mrb[0].mxu0
    %v906 = vadd.f32 %v810, %v905
    %v907 = vpop.f32.mrb[0].mxu0
    %908 = vmatprep.mubr.f32.mxu0 0.0
    %909 = vmatmul.mubr.f32.gmra.mrb[0].mxu0 %v827
    %v910 = vpop.f32.mrb[0].mxu0
    %v911 = vadd.f32 %v815, %v910
    %v912 = vpop.f32.mrb[0].mxu0
    %913 = vdwg.mxu0
    %v914 = vxor.u32 %v896, 2147483648
    %v915 = vxor.u32 %v901, 2147483648
    %v916 = vxor.u32 %v906, 2147483648
    %v917 = vxor.u32 %v911, 2147483648
    %v918 = vmul.f32 %v914, 1.442695
    %v919 = vpow.pop %v918
    %v920 = vmul.f32 %v915, 1.442695
    %v921 = vpow.pop %v920
    %v922 = vmul.f32 %v916, 1.442695
    %v923 = vpow.pop %v922
    %v924 = vmul.f32 %v917, 1.442695
    %v925 = vpow.pop %v924
    %v926 = vadd.f32 %v919, 1.0
    %v927 = vadd.f32 %v921, 1.0
    %v928 = vadd.f32 %v923, 1.0
    %v929 = vadd.f32 %v925, 1.0
    %v930 = vrcp.pop %v926
    %v931 = vmul.f32 1.0, %v930
    %v932 = vrcp.pop %v927
    %v933 = vmul.f32 1.0, %v932
    %v934 = vrcp.pop %v928
    %v935 = vmul.f32 1.0, %v934
    %v936 = vrcp.pop %v929
    %v937 = vmul.f32 1.0, %v936
    %938 = vst [vmem:[#allocation2] sm:$0xff] %v931
    %939 = vst [vmem:[#allocation2 + $0x8] sm:$0xff] %v933
    %940 = vst [vmem:[#allocation2 + $0x10] sm:$0xff] %v935
    %941 = vst [vmem:[#allocation2 + $0x18] sm:$0xff] %v937
    // Predicated region
    $region70: #{tpu_custom_call.1} parent=1 // pred_check
      _
    $region71: #{tpu_custom_call.1} parent=1 // pred_check_branch
      %943 = sbr.rel (0) target = $region73
    $region72: #{tpu_custom_call.1} parent=1 // pred_region
      %s945 = ssub.s32 512, 512
      %946 = vsyncadd [#allocation3], %s945
      %s947 = sshll.u32 [#allocation2], 4
      %s948 = int_to_ptr.vmem [resolvable:$true] %s947
      %953 = dma.vmem_to_hbm [thread:$0]  %s948, 512, %s17, [#allocation3], 128, 128, 8
    $region73: #{tpu_custom_call.1} parent=1 // pred_fallthru
      _
    // Predicated region
    $region74: #{tpu_custom_call.1} parent=1 // pred_check
      _
    $region75: #{tpu_custom_call.1} parent=1 // pred_check_branch
      %955 = sbr.rel (0) target = $region77
    $region76: #{tpu_custom_call.1} parent=1 // pred_region
      %956 = dma.done [#allocation3], 512
    $region77: #{tpu_custom_call.1} parent=1 // pred_fallthru
      _
    %957 = vsyncpa [#allocation3], 1

</llo_original>
